<compile_context>
chip_gen: v6e
topology: v6e:2x2x1
jax: 0.10.0
libtpu: 0.0.40
codegen_flags: <defaults>
</compile_context>

<pallas_src>
import functools
import math

import jax
import jax.numpy as jnp
from jax import lax
from jax.experimental import pallas as pl
from jax.experimental.pallas import tpu as pltpu


# int32 views of the 32-bit mixing constants (lowbias32-style hash / golden ratio).
_MIX_C1 = 0x7FEB352D
_MIX_C2 = 0x846CA68B - (1 << 32)
_GOLDEN = 0x9E3779B9 - (1 << 32)


# ----------------------------------------------------------------------------
# Parameter setup (equivalent of __init__ buffer `pe`)
# ----------------------------------------------------------------------------
def make_positional_encoding_table(max_len: int, d_model: int,
                                   dtype=jnp.float32) -> jnp.ndarray:
    """pe[pos, 2i] = sin(pos / 10000^(2i/d)); pe[pos, 2i+1] = cos(...)."""
    position = jnp.arange(max_len, dtype=jnp.float32)[:, None]          # (L, 1)
    div_term = jnp.exp(
        jnp.arange(0, d_model, 2, dtype=jnp.float32)
        * (-math.log(10000.0) / d_model)
    )                                                                    # (D/2,)
    angles = position * div_term                                         # (L, D/2)
    pe = jnp.zeros((max_len, d_model), dtype=jnp.float32)
    pe = pe.at[:, 0::2].set(jnp.sin(angles))
    pe = pe.at[:, 1::2].set(jnp.cos(angles))
    return pe.astype(dtype)


# ----------------------------------------------------------------------------
# Deterministic counter-based hash (works in-kernel and in plain JAX)
# ----------------------------------------------------------------------------
def _mix32(z):
    """lowbias32-style int32 mix; logical right shifts emulated with masks so
    everything stays in plain int32 ops supported by Mosaic."""
    z = z ^ ((z >> 16) & 0xFFFF)
    z = z * _MIX_C1
    z = z ^ ((z >> 15) & 0x1FFFF)
    z = z * _MIX_C2
    z = z ^ ((z >> 16) & 0xFFFF)
    return z


def _keep_threshold31(p: float) -> int:
    """Drop if hash_low31 < threshold; keep probability ~= 1 - p."""
    t = int(round(p * (1 << 31)))
    return max(0, min(t, (1 << 31) - 1))


def _dropout_keep_mask_ref(shape, seed: int, p: float):
    """Plain-JAX replica of the in-kernel mask (for verification)."""
    S, B, D = shape
    row = jnp.arange(S, dtype=jnp.int32).reshape(S, 1, 1)
    cb = jnp.arange(B, dtype=jnp.int32).reshape(1, B, 1)
    cd = jnp.arange(D, dtype=jnp.int32).reshape(1, 1, D)
    flat = (row * B + cb) * D + cd
    z = _mix32(flat + jnp.int32(seed) * _GOLDEN)
    return (z & 0x7FFFFFFF) >= _keep_threshold31(p)


# ----------------------------------------------------------------------------
# Pallas kernel: y = dropout(x + pe)
# ----------------------------------------------------------------------------
def _pe_dropout_kernel(seed_ref, x_ref, pe_ref, o_ref, *,
                       p: float, training: bool, tile_s: int,
                       batch: int, d_model: int):
    # x_ref:  (TS, B, D) tile of x (last two dims are the full B, D)
    # pe_ref: (TS, D)    tile of the positional-encoding table
    x = x_ref[...]
    pe = pe_ref[...].astype(x.dtype)          # no-op when table already in x dtype
    y = x + pe[:, None, :]                    # compute stays in x dtype (bf16 ok)

    if training and p > 0.0:
        shape = y.shape
        # Absolute element index -> tiling-independent, reproducible mask.
        row = lax.broadcasted_iota(jnp.int32, shape, 0) + pl.program_id(0) * tile_s
        col_b = lax.broadcasted_iota(jnp.int32, shape, 1)
        col_d = lax.broadcasted_iota(jnp.int32, shape, 2)
        flat = (row * batch + col_b) * d_model + col_d
        z = _mix32(flat + seed_ref[0] * _GOLDEN)
        keep = (z & 0x7FFFFFFF) >= _keep_threshold31(p)
        scale = jnp.asarray(1.0 / (1.0 - p), dtype=y.dtype)
        y = jnp.where(keep, y * scale, jnp.zeros_like(y))

    o_ref[...] = y.astype(o_ref.dtype)


def _default_seq_tile(seq_len: int, batch: int, d_model: int, itemsize: int,
                      budget_bytes: int = 2 * 1024 * 1024) -> int:
    """Pick a seq tile so one x tile is ~2 MiB: double-buffered in+out tiles
    plus the pe tile and elementwise temporaries stay comfortably within the
    scoped VMEM budget on v5e/v6e and v7x (64 MiB physical / 32 MiB scoped)."""
    row_bytes = max(1, batch * d_model * itemsize)
    rows = max(1, budget_bytes // row_bytes)
    if rows >= 8:
        rows -= rows % 8          # keep the pe tile sublane-aligned
    return int(min(seq_len, rows))


def positional_encoding_forward(
    x: jnp.ndarray,
    pe_table: jnp.ndarray,
    seed: int = 0,
    *,
    p: float = 0.1,
    training: bool = True,
    tile_s: int | None = None,
):
    """x: [seq_len, batch, d_model]; pe_table: [max_len, d_model] (full table)."""
    S, B, D = x.shape
    max_len, d_pe = pe_table.shape
    assert d_pe == D and max_len >= S

    itemsize = jnp.dtype(x.dtype).itemsize
    TS = _default_seq_tile(S, B, D, itemsize) if tile_s is None else int(tile_s)
    TS = max(1, min(TS, S))
    grid = (pl.cdiv(S, TS),)

    seed_arr = jnp.asarray([seed], dtype=jnp.int32)

    kernel = functools.partial(
        _pe_dropout_kernel, p=float(p), training=bool(training),
        tile_s=TS, batch=B, d_model=D)

    return pl.pallas_call(
        kernel,
        out_shape=jax.ShapeDtypeStruct((S, B, D), x.dtype),
        grid_spec=pltpu.PrefetchScalarGridSpec(
            num_scalar_prefetch=1,   # seed lands in SMEM
            grid=grid,
            in_specs=[
                # x tile: block only along seq; (B, D) are the full last-two dims
                pl.BlockSpec((TS, B, D), lambda i, seed: (i, 0, 0)),
                # pe tile: same seq block out of the *full* table, full d_model
                pl.BlockSpec((TS, D), lambda i, seed: (i, 0)),
            ],
            out_specs=pl.BlockSpec((TS, B, D), lambda i, seed: (i, 0, 0)),
        ),
        compiler_params=pltpu.CompilerParams(
            # Tiles are fully independent (absolute-index dropout hash), so the
            # grid axis can be sharded across both TensorCores on v7x.
            dimension_semantics=("parallel",),
            vmem_limit_bytes=32 * 1024 * 1024,
        ),
    )(seed_arr, x, pe_table)


# ----------------------------------------------------------------------------
# Demo / self-check
# ----------------------------------------------------------------------------
if __name__ == "__main__":
    d_model = 32
    seq_len = 8
    batch = 2
    max_len = 64   # module default is 5000; only the first seq_len rows are used
    p = 0.1

    key = jax.random.PRNGKey(0)
    x = jax.random.normal(key, (seq_len, batch, d_model), dtype=jnp.float32)
    pe_table = make_positional_encoding_table(max_len, d_model, dtype=x.dtype)

    ref_add = x + pe_table[:seq_len][:, None, :]

    # Eval-mode pass (dropout is identity) -> exact check vs plain-JAX reference.
    y_eval = positional_encoding_forward(x, pe_table, seed=0, p=p, training=False)
    y_eval = jax.block_until_ready(y_eval)
    assert y_eval.shape == (seq_len, batch, d_model)
    assert jnp.allclose(y_eval, ref_add, atol=1e-5, rtol=1e-5), "eval-mode mismatch"

    # Training-mode pass: dropout mask derived from (seed, absolute index) so it
    # can be reproduced exactly in plain JAX for verification.
    seed = 1234
    y_train = positional_encoding_forward(x, pe_table, seed=seed, p=p, training=True)
    y_train = jax.block_until_ready(y_train)
    keep = _dropout_keep_mask_ref((seq_len, batch, d_model), seed, p)
    ref_train = jnp.where(keep, ref_add * (1.0 / (1.0 - p)),
                          jnp.zeros_like(ref_add))
    assert jnp.allclose(y_train, ref_train, atol=1e-5, rtol=1e-5), "train-mode mismatch"

    print("KERNEL_OK")
</pallas_src>

<mosaic_0001>
module attributes {stable_mosaic.version = 11 : i64} {
  func.func @_pe_dropout_kernel(%arg0: i32, %arg1: memref<1xi32, #tpu.memory_space<smem>>, %arg2: memref<8x2x32xf32, #tpu.memory_space<vmem>>, %arg3: memref<8x32xf32, #tpu.memory_space<vmem>>, %arg4: memref<8x2x32xf32, #tpu.memory_space<vmem>>) attributes {dimension_semantics = [#tpu.dimension_semantics<parallel>], iteration_bounds = array<i64: 1>, scalar_prefetch = 1 : i64, scratch_operands = 0 : i64, tpu.core_type = #tpu.core_type<tc>, window_params = [{transform_indices = @transform_0, window_bounds = array<i64: 8, 2, 32>}, {transform_indices = @transform_1, window_bounds = array<i64: 8, 32>}, {transform_indices = @transform_2, window_bounds = array<i64: 8, 2, 32>}]} {
    %c0 = arith.constant 0 : index
    %c0_0 = arith.constant 0 : index
    %c0_1 = arith.constant 0 : index
    %0 = vector.load %arg2[%c0, %c0_0, %c0_1] : memref<8x2x32xf32, #tpu.memory_space<vmem>>, vector<8x2x32xf32>
    %c0_2 = arith.constant 0 : index
    %c0_3 = arith.constant 0 : index
    %1 = vector.load %arg3[%c0_2, %c0_3] : memref<8x32xf32, #tpu.memory_space<vmem>>, vector<8x32xf32>
    %2 = vector.shape_cast %1 : vector<8x32xf32> to vector<8x1x32xf32>
    %3 = vector.broadcast %2 : vector<8x1x32xf32> to vector<8x2x32xf32>
    %4 = arith.addf %0, %3 : vector<8x2x32xf32>
    %c0_4 = arith.constant 0 : index
    %c0_5 = arith.constant 0 : index
    %c0_6 = arith.constant 0 : index
    %5 = vector.load %arg4[%c0_4, %c0_5, %c0_6] : memref<8x2x32xf32, #tpu.memory_space<vmem>>, vector<8x2x32xf32>
    tpu.vector_store %arg4[%c0_4, %c0_5, %c0_6], %4 {strides = array<i32>} : memref<8x2x32xf32, #tpu.memory_space<vmem>>, vector<8x2x32xf32>,
    return
  }
  func.func @transform_0(%arg0: i32, %arg1: memref<1xi32, #tpu.memory_space<smem>>) -> (i32, i32, i32) {
    %c0_i32 = arith.constant 0 : i32
    %c0_i32_0 = arith.constant 0 : i32
    %c0_i32_1 = arith.constant 0 : i32
    return %arg0, %c0_i32, %c0_i32_0 : i32, i32, i32
  }
  func.func @transform_1(%arg0: i32, %arg1: memref<1xi32, #tpu.memory_space<smem>>) -> (i32, i32) {
    %c0_i32 = arith.constant 0 : i32
    %c0_i32_0 = arith.constant 0 : i32
    return %arg0, %c0_i32 : i32, i32
  }
  func.func @transform_2(%arg0: i32, %arg1: memref<1xi32, #tpu.memory_space<smem>>) -> (i32, i32, i32) {
    %c0_i32 = arith.constant 0 : i32
    %c0_i32_0 = arith.constant 0 : i32
    %c0_i32_1 = arith.constant 0 : i32
    return %arg0, %c0_i32, %c0_i32_0 : i32, i32, i32
  }
}

</mosaic_0001>

<llo_original>
// kernel: tpu_custom_call.1
$region0: #{tpu_custom_call.1}
  #allocation0 [shape = 'u32[]', space=smem, size = 0x4, offset = 0x4, fixed_abs, tag = 'smem constant byte address 0x4 - core index']
  #allocation1 [shape = 'u32[144,128]{1,0:T(1,128)}', space=vmem, size = 0x12000, scoped, tag = 'internal scratch']
  #allocation2 [shape = 's32[1]{0}', space=sflag, size = 0x4, scoped, tag = 'scoped memory for tpu_custom_call.1']
  #allocation3 [shape = 's32[1]{0:T(128)S(6)}', space=smem, size = 0x200, scoped, tag = 'prefetched SMEM operand 0']
  %s0 = inlined_call_operand.<no memory space> [shape: s32[1], index: 0, kind: input, shape index: {}]
  %s1 = inlined_call_operand.vmem [shape: f32[8,2,32], index: 1, kind: input, shape index: {}]
  %s2 = inlined_call_operand.vmem [shape: f32[64,32], index: 2, kind: input, shape index: {}]
  %s3 = inlined_call_operand.hbm [shape: f32[8,2,32], index: 3, kind: output, shape index: {}]
  %s4 = sld [smem:[#allocation0]]
  $region18: #{tpu_custom_call.1} parent=0
    _
  %s6 = ssub.s32 1, %s4
  %s7 = scalar_select 0, %s6, %s4
  %8 = sst [smem:[#allocation3]] %s0
  $region1: #{tpu_custom_call.1} parent=0
    #allocation4 [shape = 'u8[8192]{0}', space=vmem, size = 0x2000, scoped, tag = 'output window, operand 0, single buffered']
    #allocation5 [shape = 's32[1]{0}', space=sflag, size = 0x4, scoped, tag = 'scoped memory for tpu_custom_call.1']
    %9 = vsyncpa [#allocation5], 0
    // Predicated region
    $region2: #{tpu_custom_call.1} parent=1 // pred_check
      _
    $region3: #{tpu_custom_call.1} parent=1 // pred_check_branch
      %11 = sbr.rel (0) target = $region5
    $region4: #{tpu_custom_call.1} parent=1 // pred_region
      _
    $region5: #{tpu_custom_call.1} parent=1 // pred_fallthru
      _
    // Predicated region
    $region6: #{tpu_custom_call.1} parent=1 // pred_check
      _
    $region7: #{tpu_custom_call.1} parent=1 // pred_check_branch
      %13 = sbr.rel (0) target = $region9
    $region8: #{tpu_custom_call.1} parent=1 // pred_region
      _
    $region9: #{tpu_custom_call.1} parent=1 // pred_fallthru
      _
    %v14 = vld [vmem:[%s1] sm:$0x3]
    %v15 = vld [vmem:[%s1 + $0x2] sm:$0x3]
    %v16 = vld [vmem:[%s1 + $0x4] sm:$0x3]
    %v17 = vld [vmem:[%s1 + $0x6] sm:$0x3]
    %v18 = vld [vmem:[%s1 + $0x8] sm:$0x3]
    %v19 = vld [vmem:[%s1 + $0xa] sm:$0x3]
    %v20 = vld [vmem:[%s1 + $0xc] sm:$0x3]
    %v21 = vld [vmem:[%s1 + $0xe] sm:$0x3]
    %v22 = vld [vmem:[%s2] sm:$0xff]
    %v24 = vcombine.high %v22, %v22
    %v26 = vunpack.c.l.s4 1966171168
    %v27 = vunpack.c.0.s8 %v26
    %v28 = vlaneseq
    %v29 = vshrl.u32 %v28, 7
    %v30 = vsub.s32 %v27, %v29
    %v31 = vrot.slane %v22, %v30
    %v33 = vunpack.c.l.s4 1966171168
    %v34 = vunpack.c.0.s8 %v33
    %v35 = vlaneseq
    %v36 = vshrl.u32 %v35, 7
    %v37 = vsub.s32 %v34, %v36
    %v38 = vrot.slane %v24, %v37
    %v39 = vcombine.high %v31, %v31
    %v40 = vcombine.high %v38, %v38
    %v42 = vunpack.c.l.s4 1966171168
    %v43 = vunpack.c.0.s8 %v42
    %v44 = vlaneseq
    %v45 = vshrl.u32 %v44, 7
    %v46 = vsub.s32 %v43, %v45
    %v47 = vrot.slane %v31, %v46
    %v49 = vunpack.c.l.s4 1966171168
    %v50 = vunpack.c.0.s8 %v49
    %v51 = vlaneseq
    %v52 = vshrl.u32 %v51, 7
    %v53 = vsub.s32 %v50, %v52
    %v54 = vrot.slane %v38, %v53
    %v56 = vunpack.c.l.s4 1966171168
    %v57 = vunpack.c.0.s8 %v56
    %v58 = vlaneseq
    %v59 = vshrl.u32 %v58, 7
    %v60 = vsub.s32 %v57, %v59
    %v61 = vrot.slane %v39, %v60
    %v63 = vunpack.c.l.s4 1966171168
    %v64 = vunpack.c.0.s8 %v63
    %v65 = vlaneseq
    %v66 = vshrl.u32 %v65, 7
    %v67 = vsub.s32 %v64, %v66
    %v68 = vrot.slane %v40, %v67
    %v69 = vcombine.high %v47, %v47
    %v70 = vcombine.high %v54, %v54
    %v71 = vcombine.high %v61, %v61
    %v72 = vcombine.high %v68, %v68
    %v73 = vlaneseq
    %v74 = vshrl.u32 %v73, 7
    %v75 = vsub.s32 0, %v74
    %v76 = vrot.slane %v47, %v75
    %v77 = vlaneseq
    %v78 = vshrl.u32 %v77, 7
    %v79 = vsub.s32 0, %v78
    %v80 = vrot.slane %v61, %v79
    %v81 = vlaneseq
    %v82 = vshrl.u32 %v81, 7
    %v83 = vsub.s32 0, %v82
    %v84 = vrot.slane %v69, %v83
    %v85 = vlaneseq
    %v86 = vshrl.u32 %v85, 7
    %v87 = vsub.s32 0, %v86
    %v88 = vrot.slane %v71, %v87
    %v89 = vlaneseq
    %v90 = vshrl.u32 %v89, 7
    %v91 = vsub.s32 0, %v90
    %v92 = vrot.slane %v54, %v91
    %v93 = vlaneseq
    %v94 = vshrl.u32 %v93, 7
    %v95 = vsub.s32 0, %v94
    %v96 = vrot.slane %v68, %v95
    %v97 = vlaneseq
    %v98 = vshrl.u32 %v97, 7
    %v99 = vsub.s32 0, %v98
    %v100 = vrot.slane %v70, %v99
    %v101 = vlaneseq
    %v102 = vshrl.u32 %v101, 7
    %v103 = vsub.s32 0, %v102
    %v104 = vrot.slane %v72, %v103
    %v113 = vadd.f32 %v14, %v76
    %v114 = vadd.f32 %v15, %v80
    %v115 = vadd.f32 %v16, %v84
    %v116 = vadd.f32 %v17, %v88
    %v117 = vadd.f32 %v18, %v92
    %v118 = vadd.f32 %v19, %v96
    %v119 = vadd.f32 %v20, %v100
    %v120 = vadd.f32 %v21, %v104
    %vm121 = vcmask 254976
    %122 = vst.msk [vmem:[#allocation4] sm:$0x3] %vm121, %v113
    %123 = vst.msk [vmem:[#allocation4 + $0x2] sm:$0x3] %vm121, %v114
    %124 = vst.msk [vmem:[#allocation4 + $0x4] sm:$0x3] %vm121, %v115
    %125 = vst.msk [vmem:[#allocation4 + $0x6] sm:$0x3] %vm121, %v116
    %126 = vst.msk [vmem:[#allocation4 + $0x8] sm:$0x3] %vm121, %v117
    %127 = vst.msk [vmem:[#allocation4 + $0xa] sm:$0x3] %vm121, %v118
    %128 = vst.msk [vmem:[#allocation4 + $0xc] sm:$0x3] %vm121, %v119
    %129 = vst.msk [vmem:[#allocation4 + $0xe] sm:$0x3] %vm121, %v120
    // Predicated region
    $region10: #{tpu_custom_call.1} parent=1 // pred_check
      _
    $region11: #{tpu_custom_call.1} parent=1 // pred_check_branch
      %131 = sbr.rel (0) target = $region13
    $region12: #{tpu_custom_call.1} parent=1 // pred_region
      %s133 = ssub.s32 256, 256
      %134 = vsyncadd [#allocation5], %s133
      %s135 = sshll.u32 [#allocation4], 4
      %s136 = int_to_ptr.vmem [resolvable:$true] %s135
      %141 = dma.vmem_to_hbm [thread:$0]  %s136, 256, %s3, [#allocation5], 32, 32, 2
    $region13: #{tpu_custom_call.1} parent=1 // pred_fallthru
      _
    // Predicated region
    $region14: #{tpu_custom_call.1} parent=1 // pred_check
      _
    $region15: #{tpu_custom_call.1} parent=1 // pred_check_branch
      %143 = sbr.rel (0) target = $region17
    $region16: #{tpu_custom_call.1} parent=1 // pred_region
      %144 = dma.done [#allocation5], 256
    $region17: #{tpu_custom_call.1} parent=1 // pred_fallthru
      _
    %145 = vsyncpa [#allocation5], 1

</llo_original>
